<compile_context>
chip_gen: v7x
topology: tpu7x:2x2x1
jax: 0.10.0
libtpu: 0.0.40
codegen_flags: <defaults>
</compile_context>

<pallas_src>
import functools

import jax
import jax.numpy as jnp
from jax.experimental import pallas as pl
from jax.experimental.pallas import tpu as pltpu


def mlp_kernel(x_ref, w_in_ref, b_in_ref, w_hid_ref, b_hid_ref,
               w_out_ref, b_out_ref, o_ref, *, num_hidden_layers):
    """Fused MLP forward on one batch tile, transposed layout (batch on lanes).

    x_ref     : [F, TILE_B]          (compute_dtype)
    w_in_ref  : [H, F]               (compute_dtype)
    b_in_ref  : [H, 1]               (f32)
    w_hid_ref : [L, H, H]            (compute_dtype)
    b_hid_ref : [L, H, 1]            (f32)
    w_out_ref : [H, 1]               (f32, used on the VPU)
    b_out_ref : [1, 1]               (f32)
    o_ref     : [1, TILE_B]          (f32, lane-dense)
    """
    w_dtype = w_in_ref.dtype

    # ---- input layer: h^T = W_in^T @ x^T + b_in, ReLU (f32 accumulate) -----
    h = jnp.dot(w_in_ref[...], x_ref[...],
                preferred_element_type=jnp.float32) + b_in_ref[...]
    h = jnp.maximum(h, 0.0)
    # dropout (eval mode) == identity

    # ---- hidden layers (static unroll; weights resident in VMEM) -----------
    for i in range(num_hidden_layers):
        h = jnp.dot(w_hid_ref[i], h.astype(w_dtype),
                    preferred_element_type=jnp.float32) + b_hid_ref[i]
        h = jnp.maximum(h, 0.0)
        # dropout (eval mode) == identity

    # ---- output layer: hidden->1 as VPU multiply + sublane reduce (XLU) ----
    # Avoids an N=1 MXU pass and keeps the result lane-dense: [1, TILE_B].
    logits = jnp.sum(h * w_out_ref[...], axis=0, keepdims=True) + b_out_ref[...]
    o_ref[...] = jax.nn.sigmoid(logits)


def mlp_forward(x, w_in, b_in, w_hid, b_hid, w_out, b_out,
                *, tile_b=256, compute_dtype=jnp.float32):
    """x: [B, F]; w_in: [F, H]; w_hid: [L, H, H]; w_out: [H, 1]; biases 1-D."""
    batch, num_features = x.shape
    num_hidden_layers, num_hidden_units, _ = w_hid.shape

    # --- wrapper-side layout plumbing (not compute hoisting) ----------------
    # Pad batch to a multiple of tile_b and put batch on the lane axis.
    b_pad = tile_b * pl.cdiv(batch, tile_b)
    x_t = jnp.pad(x.astype(compute_dtype).T, ((0, 0), (0, b_pad - batch)))

    # Weights in [out, in] so the kernel computes W @ x^T directly.
    w_in_t = w_in.T.astype(compute_dtype)                              # [H, F]
    w_hid_t = jnp.transpose(w_hid, (0, 2, 1)).astype(compute_dtype)    # [L, H, H]
    w_out_c = w_out.astype(jnp.float32).reshape(num_hidden_units, 1)   # [H, 1]
    b_in_c = b_in.astype(jnp.float32).reshape(num_hidden_units, 1)
    b_hid_c = b_hid.astype(jnp.float32).reshape(num_hidden_layers, num_hidden_units, 1)
    b_out_c = b_out.astype(jnp.float32).reshape(1, 1)

    kernel = functools.partial(mlp_kernel, num_hidden_layers=num_hidden_layers)

    out_t = pl.pallas_call(
        kernel,
        out_shape=jax.ShapeDtypeStruct((1, b_pad), jnp.float32),
        grid_spec=pltpu.PrefetchScalarGridSpec(
            num_scalar_prefetch=0,
            grid=(b_pad // tile_b,),
            in_specs=[
                # batch tile (pipelined across the grid)
                pl.BlockSpec((num_features, tile_b), lambda i: (0, i)),
                # weights / biases: constant block index -> VMEM-resident
                pl.BlockSpec((num_hidden_units, num_features), lambda i: (0, 0)),
                pl.BlockSpec((num_hidden_units, 1), lambda i: (0, 0)),
                pl.BlockSpec((num_hidden_layers, num_hidden_units,
                              num_hidden_units), lambda i: (0, 0, 0)),
                pl.BlockSpec((num_hidden_layers, num_hidden_units, 1),
                             lambda i: (0, 0, 0)),
                pl.BlockSpec((num_hidden_units, 1), lambda i: (0, 0)),
                pl.BlockSpec((1, 1), lambda i: (0, 0)),
            ],
            # lane-dense output: batch on lanes, last dim = tile_b (>=128)
            out_specs=pl.BlockSpec((1, tile_b), lambda i: (0, i)),
        ),
        compiler_params=pltpu.CompilerParams(
            dimension_semantics=("parallel",),          # megacore on v7x
            vmem_limit_bytes=32 * 1024 * 1024,          # explicit, safe on 64 MiB v7x
        ),
    )(x_t, w_in_t, b_in_c, w_hid_t, b_hid_c, w_out_c, b_out_c)

    # Strip padding, back to the PyTorch [batch, 1] shape.
    return out_t[0, :batch].reshape(batch, 1)


def xavier_normal(key, fan_in, fan_out):
    std = jnp.sqrt(2.0 / (fan_in + fan_out))
    return std * jax.random.normal(key, (fan_in, fan_out), dtype=jnp.float32)


if __name__ == "__main__":
    # Small shapes consistent with the module's forward.
    batch = 8
    num_features = 16
    num_hidden_units = 32
    num_hidden_layers = 2

    key = jax.random.PRNGKey(0)
    k_x, k_in, k_hid, k_out = jax.random.split(key, 4)

    x = jax.random.normal(k_x, (batch, num_features), dtype=jnp.float32)

    # linear_in / hidden / linear_out: xavier_normal weights, bias = 0.01.
    w_in = xavier_normal(k_in, num_features, num_hidden_units)
    b_in = 0.01 * jnp.ones((num_hidden_units,), dtype=jnp.float32)

    hid_keys = jax.random.split(k_hid, num_hidden_layers)
    w_hid = jnp.stack(
        [xavier_normal(hid_keys[i], num_hidden_units, num_hidden_units)
         for i in range(num_hidden_layers)], axis=0)
    b_hid = 0.01 * jnp.ones((num_hidden_layers, num_hidden_units),
                            dtype=jnp.float32)

    w_out = xavier_normal(k_out, num_hidden_units, 1)
    b_out = 0.01 * jnp.ones((1,), dtype=jnp.float32)

    def ref_forward(xx):
        h = jnp.maximum(xx @ w_in + b_in, 0.0)
        for i in range(num_hidden_layers):
            h = jnp.maximum(h @ w_hid[i] + b_hid[i], 0.0)
        return jax.nn.sigmoid(h @ w_out + b_out)

    # 1) small batch, f32 — strict correctness check.
    out = jax.block_until_ready(
        mlp_forward(x, w_in, b_in, w_hid, b_hid, w_out, b_out))
    assert out.shape == (batch, 1)
    assert jnp.allclose(out, ref_forward(x), atol=1e-5, rtol=1e-5)

    # 2) larger, non-tile-multiple batch — exercises a multi-step grid + padding.
    x_big = jax.random.normal(jax.random.PRNGKey(1), (1000, num_features),
                              dtype=jnp.float32)
    out_big = jax.block_until_ready(
        mlp_forward(x_big, w_in, b_in, w_hid, b_hid, w_out, b_out, tile_b=256))
    assert out_big.shape == (1000, 1)
    assert jnp.allclose(out_big, ref_forward(x_big), atol=1e-5, rtol=1e-5)

    # 3) bf16 storage / MXU inputs (v6e/v7x fast path), f32 accumulate.
    out_bf16 = jax.block_until_ready(
        mlp_forward(x_big, w_in, b_in, w_hid, b_hid, w_out, b_out,
                    tile_b=256, compute_dtype=jnp.bfloat16))
    assert jnp.allclose(out_bf16, ref_forward(x_big), atol=5e-2)

    print("KERNEL_OK")
</pallas_src>

<mosaic_0001>
module attributes {stable_mosaic.version = 11 : i64} {
  func.func @mlp_kernel(%arg0: i32, %arg1: memref<16x256xf32, #tpu.memory_space<vmem>>, %arg2: memref<32x16xf32, #tpu.memory_space<vmem>>, %arg3: memref<32x1xf32, #tpu.memory_space<vmem>>, %arg4: memref<2x32x32xf32, #tpu.memory_space<vmem>>, %arg5: memref<2x32x1xf32, #tpu.memory_space<vmem>>, %arg6: memref<32x1xf32, #tpu.memory_space<vmem>>, %arg7: memref<1x1xf32, #tpu.memory_space<vmem>>, %arg8: memref<1x256xf32, #tpu.memory_space<vmem>>) attributes {dimension_semantics = [#tpu.dimension_semantics<parallel>], iteration_bounds = array<i64: 1>, scalar_prefetch = 0 : i64, scratch_operands = 0 : i64, tpu.core_type = #tpu.core_type<tc>, window_params = [{transform_indices = @transform_0, window_bounds = array<i64: 16, 256>}, {pipeline_mode = #tpu.pipeline_mode<synchronous>, transform_indices = @transform_1, window_bounds = array<i64: 32, 16>}, {pipeline_mode = #tpu.pipeline_mode<synchronous>, transform_indices = @transform_2, window_bounds = array<i64: 32, 1>}, {pipeline_mode = #tpu.pipeline_mode<synchronous>, transform_indices = @transform_3, window_bounds = array<i64: 2, 32, 32>}, {pipeline_mode = #tpu.pipeline_mode<synchronous>, transform_indices = @transform_4, window_bounds = array<i64: 2, 32, 1>}, {pipeline_mode = #tpu.pipeline_mode<synchronous>, transform_indices = @transform_5, window_bounds = array<i64: 32, 1>}, {pipeline_mode = #tpu.pipeline_mode<synchronous>, transform_indices = @transform_6, window_bounds = array<i64: 1, 1>}, {transform_indices = @transform_7, window_bounds = array<i64: 1, 256>}]} {
    %c0 = arith.constant 0 : index
    %c0_0 = arith.constant 0 : index
    %0 = vector.load %arg2[%c0, %c0_0] : memref<32x16xf32, #tpu.memory_space<vmem>>, vector<32x16xf32>
    %c0_1 = arith.constant 0 : index
    %c0_2 = arith.constant 0 : index
    %1 = vector.load %arg1[%c0_1, %c0_2] : memref<16x256xf32, #tpu.memory_space<vmem>>, vector<16x256xf32>
    %cst = arith.constant dense<0.000000e+00> : vector<32x256xf32>
    %2 = tpu.matmul %0, %1, %cst {dimension_numbers = #tpu.dot_dimension_numbers<[1], [0], [0], [1], [0, 0, 1, 1], [], []>} : vector<32x16xf32>, vector<16x256xf32>, vector<32x256xf32> -> vector<32x256xf32>
    %c0_3 = arith.constant 0 : index
    %c0_4 = arith.constant 0 : index
    %3 = vector.load %arg3[%c0_3, %c0_4] : memref<32x1xf32, #tpu.memory_space<vmem>>, vector<32x1xf32>
    %4 = vector.broadcast %3 : vector<32x1xf32> to vector<32x256xf32>
    %5 = arith.addf %2, %4 : vector<32x256xf32>
    %cst_5 = arith.constant 0.000000e+00 : f32
    %6 = vector.broadcast %cst_5 : f32 to vector<32x256xf32>
    %7 = arith.maximumf %5, %6 : vector<32x256xf32>
    %c0_6 = arith.constant 0 : index
    %c0_7 = arith.constant 0 : index
    %c0_8 = arith.constant 0 : index
    %8 = vector.load %arg4[%c0_6, %c0_7, %c0_8] : memref<2x32x32xf32, #tpu.memory_space<vmem>>, vector<1x32x32xf32>
    %9 = vector.shape_cast %8 : vector<1x32x32xf32> to vector<32x32xf32>
    %cst_9 = arith.constant dense<0.000000e+00> : vector<32x256xf32>
    %10 = tpu.matmul %9, %7, %cst_9 {dimension_numbers = #tpu.dot_dimension_numbers<[1], [0], [0], [1], [0, 0, 1, 1], [], []>} : vector<32x32xf32>, vector<32x256xf32>, vector<32x256xf32> -> vector<32x256xf32>
    %c0_10 = arith.constant 0 : index
    %c0_11 = arith.constant 0 : index
    %c0_12 = arith.constant 0 : index
    %11 = vector.load %arg5[%c0_10, %c0_11, %c0_12] : memref<2x32x1xf32, #tpu.memory_space<vmem>>, vector<1x32x1xf32>
    %12 = vector.shape_cast %11 : vector<1x32x1xf32> to vector<32x1xf32>
    %13 = vector.broadcast %12 : vector<32x1xf32> to vector<32x256xf32>
    %14 = arith.addf %10, %13 : vector<32x256xf32>
    %cst_13 = arith.constant 0.000000e+00 : f32
    %15 = vector.broadcast %cst_13 : f32 to vector<32x256xf32>
    %16 = arith.maximumf %14, %15 : vector<32x256xf32>
    %c1 = arith.constant 1 : index
    %c0_14 = arith.constant 0 : index
    %c0_15 = arith.constant 0 : index
    %17 = vector.load %arg4[%c1, %c0_14, %c0_15] : memref<2x32x32xf32, #tpu.memory_space<vmem>>, vector<1x32x32xf32>
    %18 = vector.shape_cast %17 : vector<1x32x32xf32> to vector<32x32xf32>
    %cst_16 = arith.constant dense<0.000000e+00> : vector<32x256xf32>
    %19 = tpu.matmul %18, %16, %cst_16 {dimension_numbers = #tpu.dot_dimension_numbers<[1], [0], [0], [1], [0, 0, 1, 1], [], []>} : vector<32x32xf32>, vector<32x256xf32>, vector<32x256xf32> -> vector<32x256xf32>
    %c1_17 = arith.constant 1 : index
    %c0_18 = arith.constant 0 : index
    %c0_19 = arith.constant 0 : index
    %20 = vector.load %arg5[%c1_17, %c0_18, %c0_19] : memref<2x32x1xf32, #tpu.memory_space<vmem>>, vector<1x32x1xf32>
    %21 = vector.shape_cast %20 : vector<1x32x1xf32> to vector<32x1xf32>
    %22 = vector.broadcast %21 : vector<32x1xf32> to vector<32x256xf32>
    %23 = arith.addf %19, %22 : vector<32x256xf32>
    %cst_20 = arith.constant 0.000000e+00 : f32
    %24 = vector.broadcast %cst_20 : f32 to vector<32x256xf32>
    %25 = arith.maximumf %23, %24 : vector<32x256xf32>
    %c0_21 = arith.constant 0 : index
    %c0_22 = arith.constant 0 : index
    %26 = vector.load %arg6[%c0_21, %c0_22] : memref<32x1xf32, #tpu.memory_space<vmem>>, vector<32x1xf32>
    %27 = vector.broadcast %26 : vector<32x1xf32> to vector<32x256xf32>
    %28 = arith.mulf %25, %27 : vector<32x256xf32>
    %cst_23 = arith.constant dense<0.000000e+00> : vector<256xf32>
    %29 = vector.multi_reduction <add>, %28, %cst_23 [0] : vector<32x256xf32> to vector<256xf32>
    %30 = vector.shape_cast %29 : vector<256xf32> to vector<1x256xf32>
    %c0_24 = arith.constant 0 : index
    %c0_25 = arith.constant 0 : index
    %31 = vector.load %arg7[%c0_24, %c0_25] : memref<1x1xf32, #tpu.memory_space<vmem>>, vector<1x1xf32>
    %32 = vector.broadcast %31 : vector<1x1xf32> to vector<1x256xf32>
    %33 = arith.addf %30, %32 : vector<1x256xf32>
    %34 = arith.negf %33 : vector<1x256xf32>
    %35 = math.exp %34 : vector<1x256xf32>
    %cst_26 = arith.constant 1.000000e+00 : f32
    %36 = vector.broadcast %cst_26 : f32 to vector<1x256xf32>
    %37 = arith.addf %36, %35 : vector<1x256xf32>
    %38 = arith.divf %36, %37 : vector<1x256xf32>
    %c0_27 = arith.constant 0 : index
    %c0_28 = arith.constant 0 : index
    %39 = vector.load %arg8[%c0_27, %c0_28] : memref<1x256xf32, #tpu.memory_space<vmem>>, vector<1x256xf32>
    tpu.vector_store %arg8[%c0_27, %c0_28], %38 {strides = array<i32>} : memref<1x256xf32, #tpu.memory_space<vmem>>, vector<1x256xf32>,
    return
  }
  func.func @transform_0(%arg0: i32) -> (i32, i32) {
    %c0_i32 = arith.constant 0 : i32
    %c0_i32_0 = arith.constant 0 : i32
    return %c0_i32, %arg0 : i32, i32
  }
  func.func @transform_1(%arg0: i32) -> (i32, i32) {
    %c0_i32 = arith.constant 0 : i32
    %c0_i32_0 = arith.constant 0 : i32
    %c0_i32_1 = arith.constant 0 : i32
    return %c0_i32, %c0_i32_0 : i32, i32
  }
  func.func @transform_2(%arg0: i32) -> (i32, i32) {
    %c0_i32 = arith.constant 0 : i32
    %c0_i32_0 = arith.constant 0 : i32
    %c0_i32_1 = arith.constant 0 : i32
    return %c0_i32, %c0_i32_0 : i32, i32
  }
  func.func @transform_3(%arg0: i32) -> (i32, i32, i32) {
    %c0_i32 = arith.constant 0 : i32
    %c0_i32_0 = arith.constant 0 : i32
    %c0_i32_1 = arith.constant 0 : i32
    %c0_i32_2 = arith.constant 0 : i32
    return %c0_i32, %c0_i32_0, %c0_i32_1 : i32, i32, i32
  }
  func.func @transform_4(%arg0: i32) -> (i32, i32, i32) {
    %c0_i32 = arith.constant 0 : i32
    %c0_i32_0 = arith.constant 0 : i32
    %c0_i32_1 = arith.constant 0 : i32
    %c0_i32_2 = arith.constant 0 : i32
    return %c0_i32, %c0_i32_0, %c0_i32_1 : i32, i32, i32
  }
  func.func @transform_5(%arg0: i32) -> (i32, i32) {
    %c0_i32 = arith.constant 0 : i32
    %c0_i32_0 = arith.constant 0 : i32
    %c0_i32_1 = arith.constant 0 : i32
    return %c0_i32, %c0_i32_0 : i32, i32
  }
  func.func @transform_6(%arg0: i32) -> (i32, i32) {
    %c0_i32 = arith.constant 0 : i32
    %c0_i32_0 = arith.constant 0 : i32
    %c0_i32_1 = arith.constant 0 : i32
    return %c0_i32, %c0_i32_0 : i32, i32
  }
  func.func @transform_7(%arg0: i32) -> (i32, i32) {
    %c0_i32 = arith.constant 0 : i32
    %c0_i32_0 = arith.constant 0 : i32
    return %c0_i32, %arg0 : i32, i32
  }
}

</mosaic_0001>

<llo_original>
// kernel: tpu_custom_call.1
$region0: #{tpu_custom_call.1}
  #allocation0 [shape = 'u32[]', space=smem, size = 0x4, offset = 0x4, fixed_abs, tag = 'smem constant byte address 0x4 - core index']
  #allocation1 [shape = 'u32[144,128]{1,0:T(1,128)}', space=vmem, size = 0x12000, scoped, tag = 'internal scratch']
  #allocation2 [shape = 'f32[1,1]{1,0:T(1,128)S(1)}', space=vmem, size = 0x200, scoped, tag = 'scoped memory for tpu_custom_call.1']
  %s0 = inlined_call_operand.vmem [shape: f32[16,256], index: 0, kind: input, shape index: {}]
  %s1 = inlined_call_operand.vmem [shape: f32[32,16], index: 1, kind: input, shape index: {}]
  %s2 = inlined_call_operand.vmem [shape: f32[32,1], index: 2, kind: input, shape index: {}]
  %s3 = inlined_call_operand.vmem [shape: f32[2,32,32], index: 3, kind: input, shape index: {}]
  %s4 = inlined_call_operand.vmem [shape: f32[2,32,1], index: 4, kind: input, shape index: {}]
  %s5 = inlined_call_operand.vmem [shape: f32[32,1], index: 5, kind: input, shape index: {}]
  %s6 = inlined_call_operand.<no memory space> [shape: f32[1,1], index: 6, kind: input, shape index: {}]
  %s7 = inlined_call_operand.hbm [shape: f32[1,256], index: 7, kind: output, shape index: {}]
  %s8 = sld [smem:[#allocation0]]
  $region38: #{tpu_custom_call.1} parent=0
    _
  %s10 = ssub.s32 1, %s8
  %s11 = scalar_select 0, %s10, %s8
  %v12 = vstv %s6
  %13 = vst [vmem:[#allocation2] sm:$0x1] %v12
  $region1: #{tpu_custom_call.1} parent=0
    #allocation3 [shape = 'u8[1024]{0}', space=vmem, size = 0x400, scoped, tag = 'output window, operand 0, single buffered']
    #allocation4 [shape = 's32[1]{0}', space=sflag, size = 0x4, scoped, tag = 'scoped memory for tpu_custom_call.1']
    %14 = vsyncpa [#allocation4], 0
    // Predicated region
    $region2: #{tpu_custom_call.1} parent=1 // pred_check
      _
    $region3: #{tpu_custom_call.1} parent=1 // pred_check_branch
      %16 = sbr.rel (0) target = $region5
    $region4: #{tpu_custom_call.1} parent=1 // pred_region
      _
    $region5: #{tpu_custom_call.1} parent=1 // pred_fallthru
      _
    // Predicated region
    $region6: #{tpu_custom_call.1} parent=1 // pred_check
      _
    $region7: #{tpu_custom_call.1} parent=1 // pred_check_branch
      %18 = sbr.rel (0) target = $region9
    $region8: #{tpu_custom_call.1} parent=1 // pred_region
      _
    $region9: #{tpu_custom_call.1} parent=1 // pred_fallthru
      _
    // Predicated region
    $region10: #{tpu_custom_call.1} parent=1 // pred_check
      _
    $region11: #{tpu_custom_call.1} parent=1 // pred_check_branch
      %20 = sbr.rel (0) target = $region13
    $region12: #{tpu_custom_call.1} parent=1 // pred_region
      _
    $region13: #{tpu_custom_call.1} parent=1 // pred_fallthru
      _
    // Predicated region
    $region14: #{tpu_custom_call.1} parent=1 // pred_check
      _
    $region15: #{tpu_custom_call.1} parent=1 // pred_check_branch
      %22 = sbr.rel (0) target = $region17
    $region16: #{tpu_custom_call.1} parent=1 // pred_region
      _
    $region17: #{tpu_custom_call.1} parent=1 // pred_fallthru
      _
    // Predicated region
    $region18: #{tpu_custom_call.1} parent=1 // pred_check
      _
    $region19: #{tpu_custom_call.1} parent=1 // pred_check_branch
      %24 = sbr.rel (0) target = $region21
    $region20: #{tpu_custom_call.1} parent=1 // pred_region
      _
    $region21: #{tpu_custom_call.1} parent=1 // pred_fallthru
      _
    // Predicated region
    $region22: #{tpu_custom_call.1} parent=1 // pred_check
      _
    $region23: #{tpu_custom_call.1} parent=1 // pred_check_branch
      %26 = sbr.rel (0) target = $region25
    $region24: #{tpu_custom_call.1} parent=1 // pred_region
      _
    $region25: #{tpu_custom_call.1} parent=1 // pred_fallthru
      _
    // Predicated region
    $region26: #{tpu_custom_call.1} parent=1 // pred_check
      _
    $region27: #{tpu_custom_call.1} parent=1 // pred_check_branch
      %28 = sbr.rel (0) target = $region29
    $region28: #{tpu_custom_call.1} parent=1 // pred_region
      _
    $region29: #{tpu_custom_call.1} parent=1 // pred_fallthru
      _
    %v29 = vld [vmem:[%s1] sm:$0xff]
    %v30 = vld [vmem:[%s1 + $0x8] sm:$0xff]
    %v31 = vld [vmem:[%s1 + $0x10] sm:$0xff]
    %v32 = vld [vmem:[%s1 + $0x18] sm:$0xff]
    %v33 = vld [vmem:[%s0] sm:$0xff]
    %v34 = vld [vmem:[%s0 + $0x8] sm:$0xff]
    %v35 = vld [vmem:[%s0 + $0x10] sm:$0xff]
    %v36 = vld [vmem:[%s0 + $0x18] sm:$0xff]
    %v37 = vld [vmem:[%s2] sm:$0xff]
    %v38 = vld [vmem:[%s2 + $0x8] sm:$0xff]
    %v39 = vld [vmem:[%s2 + $0x10] sm:$0xff]
    %v40 = vld [vmem:[%s2 + $0x18] sm:$0xff]
    %42 = vset.pattern.permute.xlu0 0
    %43 = vperm.xlu0 %42, %v37
    %v44 = vpop.permute.xlu0 %43
    %47 = vset.pattern.permute.xlu0 0
    %48 = vperm.xlu0 %47, %v38
    %v49 = vpop.permute.xlu0 %48
    %52 = vset.pattern.permute.xlu0 0
    %53 = vperm.xlu0 %52, %v39
    %v54 = vpop.permute.xlu0 %53
    %57 = vset.pattern.permute.xlu0 0
    %58 = vperm.xlu0 %57, %v40
    %v59 = vpop.permute.xlu0 %58
    %vm61 = vcmask 130048
    %v63 = vsel %vm61, %v29, 0
    %v66 = vsel %vm61, %v30, 0
    %v69 = vsel %vm61, %v31, 0
    %v72 = vsel %vm61, %v32, 0
    %74 = vmatprep.subr.mxu0 %v34
    %75 = vmatpush1.msra.mxu0 %v33
    %76 = vmatprep.subr.mxu0 %v36
    %77 = vmatpush1.msra.mxu0 %v35
    %78 = vmatprep.subr.mxu0 0.0
    %79 = vmatpush1.msra.mxu0 0.0
    %80 = vmatprep.subr.mxu0 0.0
    %81 = vmatpush1.msra.mxu0 0.0
    %82 = vmatprep.subr.mxu0 0.0
    %83 = vmatpush1.msra.mxu0 0.0
    %84 = vmatprep.subr.mxu0 0.0
    %85 = vmatpush1.msra.mxu0 0.0
    %86 = vmatprep.subr.mxu0 0.0
    %87 = vmatpush1.msra.mxu0 0.0
    %88 = vmatprep.subr.mxu0 0.0
    %89 = vmatpush1.msra.mxu0 0.0
    %90 = vmatprep.subr.mxu0 0.0
    %91 = vmatpush1.msra.mxu0 0.0
    %92 = vmatprep.subr.mxu0 0.0
    %93 = vmatpush1.msra.mxu0 0.0
    %94 = vmatprep.subr.mxu0 0.0
    %95 = vmatpush1.msra.mxu0 0.0
    %96 = vmatprep.subr.mxu0 0.0
    %97 = vmatpush1.msra.mxu0 0.0
    %98 = vmatprep.subr.mxu0 0.0
    %99 = vmatpush1.msra.mxu0 0.0
    %100 = vmatprep.subr.mxu0 0.0
    %101 = vmatpush1.msra.mxu0 0.0
    %102 = vmatprep.subr.mxu0 0.0
    %103 = vmatpush1.msra.mxu0 0.0
    %104 = vmatprep.subr.mxu0 0.0
    %105 = vmatpush1.msra.mxu0 0.0
    %106 = vmatprep.subr.mxu0 0.0
    %107 = vmatpush1.msra.mxu0 0.0
    %108 = vmatprep.subr.mxu0 0.0
    %109 = vmatpush1.msra.mxu0 0.0
    %110 = vmatprep.subr.mxu0 0.0
    %111 = vmatpush1.msra.mxu0 0.0
    %112 = vmatprep.subr.mxu0 0.0
    %113 = vmatpush1.msra.mxu0 0.0
    %114 = vmatprep.subr.mxu0 0.0
    %115 = vmatpush1.msra.mxu0 0.0
    %116 = vmatprep.subr.mxu0 0.0
    %117 = vmatpush1.msra.mxu0 0.0
    %118 = vmatprep.subr.mxu0 0.0
    %119 = vmatpush1.msra.mxu0 0.0
    %120 = vmatprep.subr.mxu0 0.0
    %121 = vmatpush1.msra.mxu0 0.0
    %122 = vmatprep.subr.mxu0 0.0
    %123 = vmatpush1.msra.mxu0 0.0
    %124 = vmatprep.subr.mxu0 0.0
    %125 = vmatpush1.msra.mxu0 0.0
    %126 = vmatprep.subr.mxu0 0.0
    %127 = vmatpush1.msra.mxu0 0.0
    %128 = vmatprep.subr.mxu0 0.0
    %129 = vmatpush1.msra.mxu0 0.0
    %130 = vmatprep.subr.mxu0 0.0
    %131 = vmatpush1.msra.mxu0 0.0
    %132 = vmatprep.subr.mxu0 0.0
    %133 = vmatpush1.msra.mxu0 0.0
    %134 = vmatprep.subr.mxu0 0.0
    %135 = vmatpush1.msra.mxu0 0.0
    %136 = vmatprep.subr.mxu0 0.0
    %137 = vmatpush1.msra.mxu0 0.0
    %138 = vmatprep.mubr.f32.mxu0 0.0
    %139 = vmatmul.mubr.f32.gmra.mrb[0].mxu0 %v63
    %v140 = vpop.f32.mrb[0].mxu0
    %v141 = vadd.f32 %v44, %v140
    %v142 = vpop.f32.mrb[0].mxu0
    %v143 = vadd.f32 %v44, %v142
    %144 = vmatprep.mubr.f32.mxu0 0.0
    %145 = vmatmul.mubr.f32.gmra.mrb[0].mxu0 %v66
    %v146 = vpop.f32.mrb[0].mxu0
    %v147 = vadd.f32 %v49, %v146
    %v148 = vpop.f32.mrb[0].mxu0
    %v149 = vadd.f32 %v49, %v148
    %150 = vmatprep.mubr.f32.mxu0 0.0
    %151 = vmatmul.mubr.f32.gmra.mrb[0].mxu0 %v69
    %v152 = vpop.f32.mrb[0].mxu0
    %v153 = vadd.f32 %v54, %v152
    %v154 = vpop.f32.mrb[0].mxu0
    %v155 = vadd.f32 %v54, %v154
    %156 = vmatprep.mubr.f32.mxu0 0.0
    %157 = vmatmul.mubr.f32.gmra.mrb[0].mxu0 %v72
    %v158 = vpop.f32.mrb[0].mxu0
    %v159 = vadd.f32 %v59, %v158
    %v160 = vpop.f32.mrb[0].mxu0
    %v161 = vadd.f32 %v59, %v160
    %162 = vdwg.mxu0
    %v163 = vmax.f32 %v141, 0.0
    %v164 = vmax.f32 %v143, 0.0
    %v165 = vmax.f32 %v147, 0.0
    %v166 = vmax.f32 %v149, 0.0
    %v167 = vmax.f32 %v153, 0.0
    %v168 = vmax.f32 %v155, 0.0
    %v169 = vmax.f32 %v159, 0.0
    %v170 = vmax.f32 %v161, 0.0
    %v171 = vld [vmem:[%s3] sm:$0xff]
    %v172 = vld [vmem:[%s3 + $0x8] sm:$0xff]
    %v173 = vld [vmem:[%s3 + $0x10] sm:$0xff]
    %v174 = vld [vmem:[%s3 + $0x18] sm:$0xff]
    %v175 = vld [vmem:[%s4] sm:$0xff]
    %v176 = vld [vmem:[%s4 + $0x8] sm:$0xff]
    %v177 = vld [vmem:[%s4 + $0x10] sm:$0xff]
    %v178 = vld [vmem:[%s4 + $0x18] sm:$0xff]
    %180 = vset.pattern.permute.xlu0 0
    %181 = vperm.xlu0 %180, %v175
    %v182 = vpop.permute.xlu0 %181
    %185 = vset.pattern.permute.xlu0 0
    %186 = vperm.xlu0 %185, %v176
    %v187 = vpop.permute.xlu0 %186
    %190 = vset.pattern.permute.xlu0 0
    %191 = vperm.xlu0 %190, %v177
    %v192 = vpop.permute.xlu0 %191
    %195 = vset.pattern.permute.xlu0 0
    %196 = vperm.xlu0 %195, %v178
    %v197 = vpop.permute.xlu0 %196
    %vm199 = vcmask 261120
    %v201 = vsel %vm199, %v171, 0
    %v204 = vsel %vm199, %v172, 0
    %v207 = vsel %vm199, %v173, 0
    %v210 = vsel %vm199, %v174, 0
    %212 = vmatprep.subr.mxu0 %v164
    %213 = vmatpush1.msra.mxu0 %v163
    %214 = vmatprep.subr.mxu0 %v166
    %215 = vmatpush1.msra.mxu0 %v165
    %216 = vmatprep.subr.mxu0 %v168
    %217 = vmatpush1.msra.mxu0 %v167
    %218 = vmatprep.subr.mxu0 %v170
    %219 = vmatpush1.msra.mxu0 %v169
    %220 = vmatprep.subr.mxu0 0.0
    %221 = vmatpush1.msra.mxu0 0.0
    %222 = vmatprep.subr.mxu0 0.0
    %223 = vmatpush1.msra.mxu0 0.0
    %224 = vmatprep.subr.mxu0 0.0
    %225 = vmatpush1.msra.mxu0 0.0
    %226 = vmatprep.subr.mxu0 0.0
    %227 = vmatpush1.msra.mxu0 0.0
    %228 = vmatprep.subr.mxu0 0.0
    %229 = vmatpush1.msra.mxu0 0.0
    %230 = vmatprep.subr.mxu0 0.0
    %231 = vmatpush1.msra.mxu0 0.0
    %232 = vmatprep.subr.mxu0 0.0
    %233 = vmatpush1.msra.mxu0 0.0
    %234 = vmatprep.subr.mxu0 0.0
    %235 = vmatpush1.msra.mxu0 0.0
    %236 = vmatprep.subr.mxu0 0.0
    %237 = vmatpush1.msra.mxu0 0.0
    %238 = vmatprep.subr.mxu0 0.0
    %239 = vmatpush1.msra.mxu0 0.0
    %240 = vmatprep.subr.mxu0 0.0
    %241 = vmatpush1.msra.mxu0 0.0
    %242 = vmatprep.subr.mxu0 0.0
    %243 = vmatpush1.msra.mxu0 0.0
    %244 = vmatprep.subr.mxu0 0.0
    %245 = vmatpush1.msra.mxu0 0.0
    %246 = vmatprep.subr.mxu0 0.0
    %247 = vmatpush1.msra.mxu0 0.0
    %248 = vmatprep.subr.mxu0 0.0
    %249 = vmatpush1.msra.mxu0 0.0
    %250 = vmatprep.subr.mxu0 0.0
    %251 = vmatpush1.msra.mxu0 0.0
    %252 = vmatprep.subr.mxu0 0.0
    %253 = vmatpush1.msra.mxu0 0.0
    %254 = vmatprep.subr.mxu0 0.0
    %255 = vmatpush1.msra.mxu0 0.0
    %256 = vmatprep.subr.mxu0 0.0
    %257 = vmatpush1.msra.mxu0 0.0
    %258 = vmatprep.subr.mxu0 0.0
    %259 = vmatpush1.msra.mxu0 0.0
    %260 = vmatprep.subr.mxu0 0.0
    %261 = vmatpush1.msra.mxu0 0.0
    %262 = vmatprep.subr.mxu0 0.0
    %263 = vmatpush1.msra.mxu0 0.0
    %264 = vmatprep.subr.mxu0 0.0
    %265 = vmatpush1.msra.mxu0 0.0
    %266 = vmatprep.subr.mxu0 0.0
    %267 = vmatpush1.msra.mxu0 0.0
    %268 = vmatprep.subr.mxu0 0.0
    %269 = vmatpush1.msra.mxu0 0.0
    %270 = vmatprep.subr.mxu0 0.0
    %271 = vmatpush1.msra.mxu0 0.0
    %272 = vmatprep.subr.mxu0 0.0
    %273 = vmatpush1.msra.mxu0 0.0
    %274 = vmatprep.subr.mxu0 0.0
    %275 = vmatpush1.msra.mxu0 0.0
    %276 = vmatprep.mubr.f32.mxu0 0.0
    %277 = vmatmul.mubr.f32.gmra.mrb[0].mxu0 %v201
    %v278 = vpop.f32.mrb[0].mxu0
    %v279 = vadd.f32 %v182, %v278
    %v280 = vpop.f32.mrb[0].mxu0
    %v281 = vadd.f32 %v182, %v280
    %282 = vmatprep.mubr.f32.mxu0 0.0
    %283 = vmatmul.mubr.f32.gmra.mrb[0].mxu0 %v204
    %v284 = vpop.f32.mrb[0].mxu0
    %v285 = vadd.f32 %v187, %v284
    %v286 = vpop.f32.mrb[0].mxu0
    %v287 = vadd.f32 %v187, %v286
    %288 = vmatprep.mubr.f32.mxu0 0.0
    %289 = vmatmul.mubr.f32.gmra.mrb[0].mxu0 %v207
    %v290 = vpop.f32.mrb[0].mxu0
    %v291 = vadd.f32 %v192, %v290
    %v292 = vpop.f32.mrb[0].mxu0
    %v293 = vadd.f32 %v192, %v292
    %294 = vmatprep.mubr.f32.mxu0 0.0
    %295 = vmatmul.mubr.f32.gmra.mrb[0].mxu0 %v210
    %v296 = vpop.f32.mrb[0].mxu0
    %v297 = vadd.f32 %v197, %v296
    %v298 = vpop.f32.mrb[0].mxu0
    %v299 = vadd.f32 %v197, %v298
    %300 = vdwg.mxu0
    %v301 = vmax.f32 %v279, 0.0
    %v302 = vmax.f32 %v281, 0.0
    %v303 = vmax.f32 %v285, 0.0
    %v304 = vmax.f32 %v287, 0.0
    %v305 = vmax.f32 %v291, 0.0
    %v306 = vmax.f32 %v293, 0.0
    %v307 = vmax.f32 %v297, 0.0
    %v308 = vmax.f32 %v299, 0.0
    %s309 = scalar_lea.vmem %s3, 32
    %v310 = vld [vmem:[%s309] sm:$0xff]
    %v311 = vld [vmem:[%s309 + $0x8] sm:$0xff]
    %v312 = vld [vmem:[%s309 + $0x10] sm:$0xff]
    %v313 = vld [vmem:[%s309 + $0x18] sm:$0xff]
    %s314 = scalar_lea.vmem %s4, 32
    %v315 = vld [vmem:[%s314] sm:$0xff]
    %v316 = vld [vmem:[%s314 + $0x8] sm:$0xff]
    %v317 = vld [vmem:[%s314 + $0x10] sm:$0xff]
    %v318 = vld [vmem:[%s314 + $0x18] sm:$0xff]
    %320 = vset.pattern.permute.xlu0 0
    %321 = vperm.xlu0 %320, %v315
    %v322 = vpop.permute.xlu0 %321
    %325 = vset.pattern.permute.xlu0 0
    %326 = vperm.xlu0 %325, %v316
    %v327 = vpop.permute.xlu0 %326
    %330 = vset.pattern.permute.xlu0 0
    %331 = vperm.xlu0 %330, %v317
    %v332 = vpop.permute.xlu0 %331
    %335 = vset.pattern.permute.xlu0 0
    %336 = vperm.xlu0 %335, %v318
    %v337 = vpop.permute.xlu0 %336
    %v340 = vsel %vm199, %v310, 0
    %v343 = vsel %vm199, %v311, 0
    %v346 = vsel %vm199, %v312, 0
    %v349 = vsel %vm199, %v313, 0
    %351 = vmatprep.subr.mxu0 %v302
    %352 = vmatpush1.msra.mxu0 %v301
    %353 = vmatprep.subr.mxu0 %v304
    %354 = vmatpush1.msra.mxu0 %v303
    %355 = vmatprep.subr.mxu0 %v306
    %356 = vmatpush1.msra.mxu0 %v305
    %357 = vmatprep.subr.mxu0 %v308
    %358 = vmatpush1.msra.mxu0 %v307
    %359 = vmatprep.subr.mxu0 0.0
    %360 = vmatpush1.msra.mxu0 0.0
    %361 = vmatprep.subr.mxu0 0.0
    %362 = vmatpush1.msra.mxu0 0.0
    %363 = vmatprep.subr.mxu0 0.0
    %364 = vmatpush1.msra.mxu0 0.0
    %365 = vmatprep.subr.mxu0 0.0
    %366 = vmatpush1.msra.mxu0 0.0
    %367 = vmatprep.subr.mxu0 0.0
    %368 = vmatpush1.msra.mxu0 0.0
    %369 = vmatprep.subr.mxu0 0.0
    %370 = vmatpush1.msra.mxu0 0.0
    %371 = vmatprep.subr.mxu0 0.0
    %372 = vmatpush1.msra.mxu0 0.0
    %373 = vmatprep.subr.mxu0 0.0
    %374 = vmatpush1.msra.mxu0 0.0
    %375 = vmatprep.subr.mxu0 0.0
    %376 = vmatpush1.msra.mxu0 0.0
    %377 = vmatprep.subr.mxu0 0.0
    %378 = vmatpush1.msra.mxu0 0.0
    %379 = vmatprep.subr.mxu0 0.0
    %380 = vmatpush1.msra.mxu0 0.0
    %381 = vmatprep.subr.mxu0 0.0
    %382 = vmatpush1.msra.mxu0 0.0
    %383 = vmatprep.subr.mxu0 0.0
    %384 = vmatpush1.msra.mxu0 0.0
    %385 = vmatprep.subr.mxu0 0.0
    %386 = vmatpush1.msra.mxu0 0.0
    %387 = vmatprep.subr.mxu0 0.0
    %388 = vmatpush1.msra.mxu0 0.0
    %389 = vmatprep.subr.mxu0 0.0
    %390 = vmatpush1.msra.mxu0 0.0
    %391 = vmatprep.subr.mxu0 0.0
    %392 = vmatpush1.msra.mxu0 0.0
    %393 = vmatprep.subr.mxu0 0.0
    %394 = vmatpush1.msra.mxu0 0.0
    %395 = vmatprep.subr.mxu0 0.0
    %396 = vmatpush1.msra.mxu0 0.0
    %397 = vmatprep.subr.mxu0 0.0
    %398 = vmatpush1.msra.mxu0 0.0
    %399 = vmatprep.subr.mxu0 0.0
    %400 = vmatpush1.msra.mxu0 0.0
    %401 = vmatprep.subr.mxu0 0.0
    %402 = vmatpush1.msra.mxu0 0.0
    %403 = vmatprep.subr.mxu0 0.0
    %404 = vmatpush1.msra.mxu0 0.0
    %405 = vmatprep.subr.mxu0 0.0
    %406 = vmatpush1.msra.mxu0 0.0
    %407 = vmatprep.subr.mxu0 0.0
    %408 = vmatpush1.msra.mxu0 0.0
    %409 = vmatprep.subr.mxu0 0.0
    %410 = vmatpush1.msra.mxu0 0.0
    %411 = vmatprep.subr.mxu0 0.0
    %412 = vmatpush1.msra.mxu0 0.0
    %413 = vmatprep.subr.mxu0 0.0
    %414 = vmatpush1.msra.mxu0 0.0
    %415 = vmatprep.mubr.f32.mxu0 0.0
    %416 = vmatmul.mubr.f32.gmra.mrb[0].mxu0 %v340
    %v417 = vpop.f32.mrb[0].mxu0
    %v418 = vadd.f32 %v322, %v417
    %v419 = vpop.f32.mrb[0].mxu0
    %v420 = vadd.f32 %v322, %v419
    %421 = vmatprep.mubr.f32.mxu0 0.0
    %422 = vmatmul.mubr.f32.gmra.mrb[0].mxu0 %v343
    %v423 = vpop.f32.mrb[0].mxu0
    %v424 = vadd.f32 %v327, %v423
    %v425 = vpop.f32.mrb[0].mxu0
    %v426 = vadd.f32 %v327, %v425
    %427 = vmatprep.mubr.f32.mxu0 0.0
    %428 = vmatmul.mubr.f32.gmra.mrb[0].mxu0 %v346
    %v429 = vpop.f32.mrb[0].mxu0
    %v430 = vadd.f32 %v332, %v429
    %v431 = vpop.f32.mrb[0].mxu0
    %v432 = vadd.f32 %v332, %v431
    %433 = vmatprep.mubr.f32.mxu0 0.0
    %434 = vmatmul.mubr.f32.gmra.mrb[0].mxu0 %v349
    %v435 = vpop.f32.mrb[0].mxu0
    %v436 = vadd.f32 %v337, %v435
    %v437 = vpop.f32.mrb[0].mxu0
    %v438 = vadd.f32 %v337, %v437
    %439 = vdwg.mxu0
    %v440 = vmax.f32 %v418, 0.0
    %v441 = vmax.f32 %v420, 0.0
    %v442 = vmax.f32 %v424, 0.0
    %v443 = vmax.f32 %v426, 0.0
    %v444 = vmax.f32 %v430, 0.0
    %v445 = vmax.f32 %v432, 0.0
    %v446 = vmax.f32 %v436, 0.0
    %v447 = vmax.f32 %v438, 0.0
    %v448 = vld [vmem:[%s5] sm:$0xff]
    %v449 = vld [vmem:[%s5 + $0x8] sm:$0xff]
    %v450 = vld [vmem:[%s5 + $0x10] sm:$0xff]
    %v451 = vld [vmem:[%s5 + $0x18] sm:$0xff]
    %453 = vset.pattern.permute.xlu0 0
    %454 = vperm.xlu0 %453, %v448
    %v455 = vpop.permute.xlu0 %454
    %458 = vset.pattern.permute.xlu0 0
    %459 = vperm.xlu0 %458, %v449
    %v460 = vpop.permute.xlu0 %459
    %463 = vset.pattern.permute.xlu0 0
    %464 = vperm.xlu0 %463, %v450
    %v465 = vpop.permute.xlu0 %464
    %468 = vset.pattern.permute.xlu0 0
    %469 = vperm.xlu0 %468, %v451
    %v470 = vpop.permute.xlu0 %469
    %v472 = vmul.f32 %v440, %v455
    %v473 = vmul.f32 %v441, %v455
    %v474 = vmul.f32 %v442, %v460
    %v475 = vmul.f32 %v443, %v460
    %v476 = vmul.f32 %v444, %v465
    %v477 = vmul.f32 %v445, %v465
    %v478 = vmul.f32 %v446, %v470
    %v479 = vmul.f32 %v447, %v470
    %v480 = vadd.f32 %v472, %v474
    %v481 = vadd.f32 %v480, %v476
    %v482 = vadd.f32 %v481, %v478
    %v483 = vrot.slane %v482, 4
    %v484 = vadd.f32 %v482, %v483
    %v485 = vrot.slane %v484, 2
    %v486 = vadd.f32 %v484, %v485
    %v487 = vrot.slane %v486, 1
    %v488 = vadd.f32 %v486, %v487
    %v489 = vadd.f32 %v473, %v475
    %v490 = vadd.f32 %v489, %v477
    %v491 = vadd.f32 %v490, %v479
    %v492 = vrot.slane %v491, 4
    %v493 = vadd.f32 %v491, %v492
    %v494 = vrot.slane %v493, 2
    %v495 = vadd.f32 %v493, %v494
    %v496 = vrot.slane %v495, 1
    %v497 = vadd.f32 %v495, %v496
    %v498 = vld [vmem:[#allocation2] sm:$0x1]
    %500 = vset.pattern.permute.xlu0 0
    %501 = vperm.xlu0 %500, %v498
    %v502 = vpop.permute.xlu0 %501
    %v504 = vlaneseq
    %v505 = vshrl.u32 %v504, 7
    %v506 = vsub.s32 0, %v505
    %v507 = vrot.slane %v502, %v506
    %v508 = vadd.f32 %v488, %v507
    %v509 = vadd.f32 %v497, %v507
    %v510 = vxor.u32 %v508, 2147483648
    %v511 = vxor.u32 %v509, 2147483648
    %v512 = vmul.f32 %v510, 1.442695
    %v513 = vpow.pop %v512
    %v514 = vmul.f32 %v511, 1.442695
    %v515 = vpow.pop %v514
    %v516 = vadd.f32 %v513, 1.0
    %v517 = vadd.f32 %v515, 1.0
    %v518 = vrcp.pop %v516
    %v519 = vmul.f32 1.0, %v518
    %v520 = vrcp.pop %v517
    %v521 = vmul.f32 1.0, %v520
    %v524 = vcombine.low %v519, %v521
    %v526 = vunpack.c.l.s4 1966171168
    %v527 = vunpack.c.0.s8 %v526
    %v528 = vlaneseq
    %v529 = vshrl.u32 %v528, 7
    %v530 = vsub.s32 %v527, %v529
    %v531 = vrot.slane %v524, %v530
    %v533 = vunpack.c.l.s4 1966171168
    %v534 = vunpack.c.0.s8 %v533
    %v535 = vlaneseq
    %v536 = vshrl.u32 %v535, 7
    %v537 = vsub.s32 %v534, %v536
    %v538 = vrot.slane %v531, %v537
    %v540 = vlaneseq
    %vm541 = vcmp.ge.s32.totalorder %v540, 0
    %vm542 = vcmp.lt.s32.totalorder %v540, 256
    %vm543 = vmand %vm541, %vm542
    %544 = vst.msk [vmem:[#allocation3] sm:$0x3] %vm543, %v538
    // Predicated region
    $region30: #{tpu_custom_call.1} parent=1 // pred_check
      _
    $region31: #{tpu_custom_call.1} parent=1 // pred_check_branch
      %546 = sbr.rel (0) target = $region33
    $region32: #{tpu_custom_call.1} parent=1 // pred_region
      %s548 = ssub.s32 32, 32
      %549 = vsyncadd [#allocation4], %s548
      %s551 = sshll.u32 [#allocation3], 4
      %s552 = int_to_ptr.vmem [resolvable:$true] %s551
      %554 = dma.vmem_to_hbm [thread:$0]  %s552, 32, %s7, [#allocation4]
    $region33: #{tpu_custom_call.1} parent=1 // pred_fallthru
      _
    // Predicated region
    $region34: #{tpu_custom_call.1} parent=1 // pred_check
      _
    $region35: #{tpu_custom_call.1} parent=1 // pred_check_branch
      %556 = sbr.rel (0) target = $region37
    $region36: #{tpu_custom_call.1} parent=1 // pred_region
      %557 = dma.done [#allocation4], 32
    $region37: #{tpu_custom_call.1} parent=1 // pred_fallthru
      _
    %558 = vsyncpa [#allocation4], 1

</llo_original>
